<compile_context>
chip_gen: v5e
topology: v5e:2x2
jax: 0.10.0
libtpu: 0.0.40
codegen_flags: <defaults>
</compile_context>

<pallas_src>
import functools
import math

import jax
import jax.numpy as jnp
from jax.experimental import pallas as pl
from jax.experimental.pallas import tpu as pltpu


def _round_up(x, m):
    return ((x + m - 1) // m) * m


def _vmem_capacity_bytes():
    """Physical VMEM per TensorCore; conservative fallback if unknown."""
    try:
        info = pltpu.get_tpu_info()
        cap = getattr(info, "vmem_capacity_bytes", None)
        if cap:
            return int(cap)
    except Exception:
        pass
    return 64 * 1024 * 1024  # v7x per-TC size as the safe lower bound


def _tile_caps(vmem_cap):
    """(tm_cap, tn_cap, tk_cap, vmem_limit_bytes) per chip generation."""
    if vmem_cap >= 96 * 1024 * 1024:
        # v5e / v6e: 128 MiB physical VMEM -> long K strips, big scoped limit.
        return 512, 512, 2048, min(100 * 1024 * 1024, (vmem_cap * 3) // 4)
    # v7x: 64 MiB per TensorCore -> same M/N tiles, shorter K strip.
    return 512, 512, 1024, min(52 * 1024 * 1024, (vmem_cap * 3) // 4)


def _pick_tile(dim, cap):
    """Full dim if it fits one tile (no pad, always legal); else the cap."""
    return dim if dim <= cap else cap


def _multilinear_kernel(x_ref, w_ref, b_ref, o_ref):
    """One (tm, tn) output tile; K is the innermost reduction grid axis.

    Accumulates directly into the resident f32 output block (no scratch);
    bias is added only in the k == last epilogue.
    """
    k = pl.program_id(2)

    @pl.when(k == 0)
    def _():
        o_ref[...] = jnp.zeros_like(o_ref)

    o_ref[...] += jnp.dot(
        x_ref[...], w_ref[...], preferred_element_type=jnp.float32
    )

    @pl.when(k == pl.num_programs(2) - 1)
    def _():
        o_ref[...] += b_ref[...].astype(o_ref.dtype)


def prepare_multilinear(weight, bias, compute_dtype=jnp.bfloat16):
    """One-time packing of weight/bias (reshape to 2-D, pad to tile multiples,
    cast to the MXU operand dtype). Do this at init, not per forward."""
    I, H, D = weight.shape
    assert bias.shape == (H, D)
    K, N = I, H * D

    vmem_cap = _vmem_capacity_bytes()
    tm_cap, tn_cap, tk_cap, vmem_limit = _tile_caps(vmem_cap)

    tk = _pick_tile(K, tk_cap)
    tn = _pick_tile(N, tn_cap)
    Kp, Np = _round_up(K, tk), _round_up(N, tn)

    w2d = weight.reshape(K, N)
    b2d = bias.reshape(1, N)
    if (Kp, Np) != (K, N):
        w2d = jnp.pad(w2d, ((0, Kp - K), (0, Np - N)))
    if Np != N:
        b2d = jnp.pad(b2d, ((0, 0), (0, Np - N)))

    return {
        "w2d": w2d.astype(compute_dtype),   # MXU operand dtype (bf16 default)
        "b2d": b2d.astype(jnp.float32),     # bias stays f32 (epilogue add)
        "H": H,
        "D": D,
        "K": K,
        "N": N,
        "tk": tk,
        "tn": tn,
        "tm_cap": tm_cap,
        "vmem_limit": vmem_limit,
    }


@functools.partial(
    jax.jit, static_argnames=("tm", "tn", "tk", "H", "D", "vmem_limit")
)
def _multilinear_fwd(x, w2d, b2d, *, tm, tn, tk, H, D, vmem_limit):
    B, T, K = x.shape
    Kp, Np = w2d.shape
    N = H * D
    M = B * T
    Mp = _round_up(M, tm)

    # Only the activation is touched per call; weight/bias are pre-packed.
    x2d = x.reshape(M, K).astype(w2d.dtype)
    if (Mp, Kp) != (M, K):
        x2d = jnp.pad(x2d, ((0, Mp - M), (0, Kp - K)))

    grid = (Mp // tm, Np // tn, Kp // tk)

    in_bytes = jnp.dtype(w2d.dtype).itemsize
    cost = pl.CostEstimate(
        flops=2 * M * N * K,
        transcendentals=0,
        bytes_accessed=(M * K + K * N) * in_bytes + (N + M * N) * 4,
    )

    out2d = pl.pallas_call(
        _multilinear_kernel,
        out_shape=jax.ShapeDtypeStruct((Mp, Np), jnp.float32),
        grid_spec=pltpu.PrefetchScalarGridSpec(
            num_scalar_prefetch=0,
            grid=grid,
            in_specs=[
                pl.BlockSpec((tm, tk), lambda i, j, k: (i, k)),
                pl.BlockSpec((tk, tn), lambda i, j, k: (k, j)),
                pl.BlockSpec((1, tn), lambda i, j, k: (0, j)),
            ],
            out_specs=pl.BlockSpec((tm, tn), lambda i, j, k: (i, j)),
        ),
        compiler_params=pltpu.CompilerParams(
            dimension_semantics=("parallel", "parallel", "arbitrary"),
            vmem_limit_bytes=vmem_limit,
        ),
        cost_estimate=cost,
    )(x2d, w2d, b2d)

    return out2d[:M, :N].reshape(B, T, H, D)


def multilinear_apply(params, x):
    """Forward with pre-packed params: einsum('bti,ihd->bthd', x, W) + b."""
    B, T, I = x.shape
    assert I == params["K"]
    M = B * T
    tm = _pick_tile(M, params["tm_cap"])
    return _multilinear_fwd(
        x,
        params["w2d"],
        params["b2d"],
        tm=tm,
        tn=params["tn"],
        tk=params["tk"],
        H=params["H"],
        D=params["D"],
        vmem_limit=params["vmem_limit"],
    )


def multilinear(x, weight, bias, *, compute_dtype=jnp.bfloat16):
    """Convenience one-shot wrapper. For repeated use, call
    prepare_multilinear() once and multilinear_apply() per step.
    compute_dtype=float32 gives exact torch-f32 semantics; bfloat16 (default)
    keeps f32 accumulation but rounds the MXU operands."""
    params = prepare_multilinear(weight, bias, compute_dtype=compute_dtype)
    return multilinear_apply(params, x)


def _xavier_normal(key, shape):
    # Matches torch.nn.init.xavier_normal_ fan computation.
    if len(shape) >= 2:
        receptive = 1
        for s in shape[2:]:
            receptive *= s
        fan_in = shape[1] * receptive
        fan_out = shape[0] * receptive
    else:
        fan_in = fan_out = shape[0]
    std = math.sqrt(2.0 / (fan_in + fan_out))
    return std * jax.random.normal(key, shape, dtype=jnp.float32)


if __name__ == "__main__":
    key = jax.random.PRNGKey(0)
    kx, kw, kb, kx2, kw2, kb2 = jax.random.split(key, 6)

    # --- small shape consistent with the module's forward ---
    B, T, I, H, D = 2, 8, 32, 4, 8
    x = jax.random.normal(kx, (B, T, I), dtype=jnp.float32)
    weight = _xavier_normal(kw, (I, H, D))
    bias = _xavier_normal(kb, (H, D))

    ref = jnp.einsum("bti,ihd->bthd", x, weight) + bias

    # Exact-semantics f32 path.
    out_f32 = jax.block_until_ready(
        multilinear(x, weight, bias, compute_dtype=jnp.float32)
    )
    assert out_f32.shape == (B, T, H, D)
    assert jnp.allclose(out_f32, ref, atol=1e-5, rtol=1e-5), "f32 mismatch"

    # Default bf16-operand / f32-accumulate fast path.
    out_bf16 = jax.block_until_ready(multilinear(x, weight, bias))
    assert jnp.allclose(out_bf16, ref, atol=5e-2, rtol=5e-2), "bf16 mismatch"

    # --- larger shape: exercises multi-tile M/N grid, padding, prepack reuse ---
    B2, T2, I2, H2, D2 = 8, 160, 256, 16, 48   # M=1280 (3 M-tiles), N=768 (2 N-tiles)
    x2 = jax.random.normal(kx2, (B2, T2, I2), dtype=jnp.float32)
    w2 = _xavier_normal(kw2, (I2, H2, D2))
    b2 = _xavier_normal(kb2, (H2, D2))

    ref2 = jnp.einsum("bti,ihd->bthd", x2, w2) + b2

    params_f32 = prepare_multilinear(w2, b2, compute_dtype=jnp.float32)
    out2 = jax.block_until_ready(multilinear_apply(params_f32, x2))
    assert out2.shape == (B2, T2, H2, D2)
    assert jnp.allclose(out2, ref2, atol=1e-4, rtol=1e-4), "tiled f32 mismatch"

    params_bf16 = prepare_multilinear(w2, b2)  # bf16 default, packed once
    out2_bf16 = jax.block_until_ready(multilinear_apply(params_bf16, x2))
    assert jnp.allclose(out2_bf16, ref2, atol=5e-2, rtol=5e-2), "tiled bf16 mismatch"

    print("KERNEL_OK")
</pallas_src>

<mosaic_0001>
module attributes {stable_mosaic.version = 11 : i64} {
  func.func @_multilinear_kernel(%arg0: i32, %arg1: i32, %arg2: i32, %arg3: memref<16x32xf32, #tpu.memory_space<vmem>>, %arg4: memref<32x32xf32, #tpu.memory_space<vmem>>, %arg5: memref<1x32xf32, #tpu.memory_space<vmem>>, %arg6: memref<16x32xf32, #tpu.memory_space<vmem>>) attributes {dimension_semantics = [#tpu.dimension_semantics<parallel>, #tpu.dimension_semantics<parallel>, #tpu.dimension_semantics<arbitrary>], iteration_bounds = array<i64: 1, 1, 1>, scalar_prefetch = 0 : i64, scratch_operands = 0 : i64, tpu.core_type = #tpu.core_type<tc>, window_params = [{transform_indices = @transform_0, window_bounds = array<i64: 16, 32>}, {transform_indices = @transform_1, window_bounds = array<i64: 32, 32>}, {transform_indices = @transform_2, window_bounds = array<i64: 1, 32>}, {transform_indices = @transform_3, window_bounds = array<i64: 16, 32>}]} {
    %c0_i32 = arith.constant 0 : i32
    %0 = arith.cmpi eq, %arg2, %c0_i32 : i32
    %1 = arith.extui %0 : i1 to i32
    %c0_i32_0 = arith.constant 0 : i32
    %2 = arith.cmpi ne, %1, %c0_i32_0 : i32
    scf.if %2 {
      %cst_10 = arith.constant 0.000000e+00 : f32
      %12 = vector.broadcast %cst_10 : f32 to vector<16x32xf32>
      %c0_11 = arith.constant 0 : index
      %c0_12 = arith.constant 0 : index
      %13 = vector.load %arg6[%c0_11, %c0_12] : memref<16x32xf32, #tpu.memory_space<vmem>>, vector<16x32xf32>
      tpu.vector_store %arg6[%c0_11, %c0_12], %12 {strides = array<i32>} : memref<16x32xf32, #tpu.memory_space<vmem>>, vector<16x32xf32>,
    } else {
    }
    %c0 = arith.constant 0 : index
    %c0_1 = arith.constant 0 : index
    %3 = vector.load %arg6[%c0, %c0_1] : memref<16x32xf32, #tpu.memory_space<vmem>>, vector<16x32xf32>
    %c0_2 = arith.constant 0 : index
    %c0_3 = arith.constant 0 : index
    %4 = vector.load %arg3[%c0_2, %c0_3] : memref<16x32xf32, #tpu.memory_space<vmem>>, vector<16x32xf32>
    %c0_4 = arith.constant 0 : index
    %c0_5 = arith.constant 0 : index
    %5 = vector.load %arg4[%c0_4, %c0_5] : memref<32x32xf32, #tpu.memory_space<vmem>>, vector<32x32xf32>
    %cst = arith.constant dense<0.000000e+00> : vector<16x32xf32>
    %6 = tpu.matmul %4, %5, %cst {dimension_numbers = #tpu.dot_dimension_numbers<[1], [0], [0], [1], [0, 0, 1, 1], [], []>} : vector<16x32xf32>, vector<32x32xf32>, vector<16x32xf32> -> vector<16x32xf32>
    %7 = arith.addf %3, %6 : vector<16x32xf32>
    %c0_6 = arith.constant 0 : index
    %c0_7 = arith.constant 0 : index
    %8 = vector.load %arg6[%c0_6, %c0_7] : memref<16x32xf32, #tpu.memory_space<vmem>>, vector<16x32xf32>
    tpu.vector_store %arg6[%c0_6, %c0_7], %7 {strides = array<i32>} : memref<16x32xf32, #tpu.memory_space<vmem>>, vector<16x32xf32>,
    %c0_i32_8 = arith.constant 0 : i32
    %9 = arith.cmpi eq, %arg2, %c0_i32_8 : i32
    %10 = arith.extui %9 : i1 to i32
    %c0_i32_9 = arith.constant 0 : i32
    %11 = arith.cmpi ne, %10, %c0_i32_9 : i32
    scf.if %11 {
      %c0_10 = arith.constant 0 : index
      %c0_11 = arith.constant 0 : index
      %12 = vector.load %arg6[%c0_10, %c0_11] : memref<16x32xf32, #tpu.memory_space<vmem>>, vector<16x32xf32>
      %c0_12 = arith.constant 0 : index
      %c0_13 = arith.constant 0 : index
      %13 = vector.load %arg5[%c0_12, %c0_13] : memref<1x32xf32, #tpu.memory_space<vmem>>, vector<1x32xf32>
      %14 = vector.broadcast %13 : vector<1x32xf32> to vector<16x32xf32>
      %15 = arith.addf %12, %14 : vector<16x32xf32>
      %c0_14 = arith.constant 0 : index
      %c0_15 = arith.constant 0 : index
      %16 = vector.load %arg6[%c0_14, %c0_15] : memref<16x32xf32, #tpu.memory_space<vmem>>, vector<16x32xf32>
      tpu.vector_store %arg6[%c0_14, %c0_15], %15 {strides = array<i32>} : memref<16x32xf32, #tpu.memory_space<vmem>>, vector<16x32xf32>,
    } else {
    }
    return
  }
  func.func @transform_0(%arg0: i32, %arg1: i32, %arg2: i32) -> (i32, i32) {
    %c0_i32 = arith.constant 0 : i32
    return %arg0, %arg2 : i32, i32
  }
  func.func @transform_1(%arg0: i32, %arg1: i32, %arg2: i32) -> (i32, i32) {
    %c0_i32 = arith.constant 0 : i32
    return %arg2, %arg1 : i32, i32
  }
  func.func @transform_2(%arg0: i32, %arg1: i32, %arg2: i32) -> (i32, i32) {
    %c0_i32 = arith.constant 0 : i32
    %c0_i32_0 = arith.constant 0 : i32
    return %c0_i32, %arg1 : i32, i32
  }
  func.func @transform_3(%arg0: i32, %arg1: i32, %arg2: i32) -> (i32, i32) {
    %c0_i32 = arith.constant 0 : i32
    return %arg0, %arg1 : i32, i32
  }
}

</mosaic_0001>

<llo_original>
// kernel: _multilinear_fwd.1
$region0: #{_multilinear_fwd.1}
  #allocation0 [shape = 'u32[]', space=smem, size = 0x4, offset = 0x4, fixed_abs, tag = 'smem constant byte address 0x4 - core index']
  #allocation1 [shape = 'u32[72,128]{1,0:T(1,128)}', space=vmem, size = 0x9000, scoped, tag = 'internal scratch']
  %s0 = inlined_call_operand.hbm [shape: f32[16,32], index: 0, kind: input, shape index: {}]
  %s1 = inlined_call_operand.hbm [shape: f32[32,32], index: 1, kind: input, shape index: {}]
  %s2 = inlined_call_operand.vmem [shape: f32[1,32], index: 2, kind: input, shape index: {}]
  %s3 = inlined_call_operand.vmem [shape: f32[16,32], index: 3, kind: output, shape index: {}]
  %s4 = sld [smem:[#allocation0]]
  $region38: #{_multilinear_fwd.1} parent=0
    _
  %s6 = ssub.s32 1, %s4
  %s7 = scalar_select 0, %s6, %s4
  $region1: #{_multilinear_fwd.1} parent=0
    #allocation2 [shape = 'u8[8192]{0}', space=vmem, size = 0x2000, scoped, tag = 'input window, operand 0, single buffered']
    #allocation3 [shape = 's32[1]{0}', space=sflag, size = 0x4, scoped, tag = 'scoped memory for _multilinear_fwd.1']
    #allocation4 [shape = 'u8[16384]{0}', space=vmem, size = 0x4000, scoped, tag = 'input window, operand 1, single buffered']
    #allocation5 [shape = 's32[1]{0}', space=sflag, size = 0x4, scoped, tag = 'scoped memory for _multilinear_fwd.1']
    %8 = vsyncpa [#allocation3], 0
    %9 = vsyncpa [#allocation5], 0
    // Predicated region
    $region2: #{_multilinear_fwd.1} parent=1 // pred_check
      _
    $region3: #{_multilinear_fwd.1} parent=1 // pred_check_branch
      %11 = sbr.rel (0) target = $region5
    $region4: #{_multilinear_fwd.1} parent=1 // pred_region
      %13 = vsyncadd [#allocation3], 0
      %s14 = sshll.u32 %s0, 4
      %s15 = int_to_ptr.hbm [resolvable:$true] %s14
      %s16 = sshll.u32 [#allocation2], 4
      %s17 = int_to_ptr.vmem [resolvable:$true] %s16
      %22 = dma.hbm_to_vmem [thread:$0]  %s15, 256, %s17, [#allocation3], 128, 128, 8
    $region5: #{_multilinear_fwd.1} parent=1 // pred_fallthru
      _
    // Predicated region
    $region6: #{_multilinear_fwd.1} parent=1 // pred_check
      _
    $region7: #{_multilinear_fwd.1} parent=1 // pred_check_branch
      %24 = sbr.rel (0) target = $region9
    $region8: #{_multilinear_fwd.1} parent=1 // pred_region
      %26 = vsyncadd [#allocation5], 0
      %s27 = sshll.u32 %s1, 4
      %s28 = int_to_ptr.hbm [resolvable:$true] %s27
      %s29 = sshll.u32 [#allocation4], 4
      %s30 = int_to_ptr.vmem [resolvable:$true] %s29
      %35 = dma.hbm_to_vmem [thread:$0]  %s28, 512, %s30, [#allocation5], 128, 128, 8
    $region9: #{_multilinear_fwd.1} parent=1 // pred_fallthru
      _
    // Predicated region
    $region10: #{_multilinear_fwd.1} parent=1 // pred_check
      _
    $region11: #{_multilinear_fwd.1} parent=1 // pred_check_branch
      %37 = sbr.rel (0) target = $region13
    $region12: #{_multilinear_fwd.1} parent=1 // pred_region
      _
    $region13: #{_multilinear_fwd.1} parent=1 // pred_fallthru
      _
    // Predicated region
    $region14: #{_multilinear_fwd.1} parent=1 // pred_check
      _
    $region15: #{_multilinear_fwd.1} parent=1 // pred_check_branch
      %39 = sbr.rel (0) target = $region17
    $region16: #{_multilinear_fwd.1} parent=1 // pred_region
      %41 = dma.done [#allocation3], 256
    $region17: #{_multilinear_fwd.1} parent=1 // pred_fallthru
      _
    // Predicated region
    $region18: #{_multilinear_fwd.1} parent=1 // pred_check
      _
    $region19: #{_multilinear_fwd.1} parent=1 // pred_check_branch
      %43 = sbr.rel (0) target = $region21
    $region20: #{_multilinear_fwd.1} parent=1 // pred_region
      %45 = dma.done [#allocation5], 512
    $region21: #{_multilinear_fwd.1} parent=1 // pred_fallthru
      _
    %p46 = scmp.eq.s32.totalorder 0, 0
    // Predicated region
    $region22: #{_multilinear_fwd.1} parent=1 // pred_check
      %p47 = pneg %p46
    $region23: #{_multilinear_fwd.1} parent=1 // pred_check_branch
      %49 = sbr.rel (%p47) target = $region25
    $region24: #{_multilinear_fwd.1} parent=1 // pred_region
      %vm50 = vcmask 261120
      %51 = vst.msk [vmem:[%s3] sm:$0xff] %vm50, 0.0
      %52 = vst.msk [vmem:[%s3 + $0x8] sm:$0xff] %vm50, 0.0
    $region25: #{_multilinear_fwd.1} parent=1 // pred_fallthru
      _
    %v53 = vld [vmem:[%s3] sm:$0xff]
    %v54 = vld [vmem:[%s3 + $0x8] sm:$0xff]
    %v55 = vld [vmem:[#allocation2] sm:$0xff]
    %v56 = vld [vmem:[#allocation2 + $0x8] sm:$0xff]
    %v57 = vld [vmem:[#allocation4] sm:$0xff]
    %v58 = vld [vmem:[#allocation4 + $0x8] sm:$0xff]
    %v59 = vld [vmem:[#allocation4 + $0x10] sm:$0xff]
    %v60 = vld [vmem:[#allocation4 + $0x18] sm:$0xff]
    %vm61 = vcmask 261120
    %v63 = vsel %vm61, %v55, 0
    %v66 = vsel %vm61, %v56, 0
    %68 = vmatpush.msra.mxu0 0.0
    %69 = vmatpush.msra.mxu0 0.0
    %70 = vmatpush.msra.mxu0 0.0
    %71 = vmatpush.msra.mxu0 0.0
    %72 = vmatpush.msra.mxu0 0.0
    %73 = vmatpush.msra.mxu0 0.0
    %74 = vmatpush.msra.mxu0 0.0
    %75 = vmatpush.msra.mxu0 0.0
    %76 = vmatpush.msra.mxu0 0.0
    %77 = vmatpush.msra.mxu0 0.0
    %78 = vmatpush.msra.mxu0 0.0
    %79 = vmatpush.msra.mxu0 0.0
    %80 = vmatpush.msra.mxu0 %v60
    %81 = vmatpush.msra.mxu0 %v59
    %82 = vmatpush.msra.mxu0 %v58
    %83 = vmatpush.msra.mxu0 %v57
    %84 = vmatmul.f32.gmra.mxu0 %v63
    %v85 = vpop.f32.mrf.mxu0
    %v86 = vadd.f32 0.0, %v85
    %87 = vmatmul.f32.gmra.mxu0 %v66
    %v88 = vpop.f32.mrf.mxu0
    %v89 = vadd.f32 0.0, %v88
    %90 = vdwg.mxu0
    %v91 = vadd.f32 %v53, %v86
    %v92 = vadd.f32 %v54, %v89
    %93 = vst.msk [vmem:[%s3] sm:$0xff] %vm61, %v91
    %94 = vst.msk [vmem:[%s3 + $0x8] sm:$0xff] %vm61, %v92
    // Predicated region
    $region26: #{_multilinear_fwd.1} parent=1 // pred_check
      %p95 = pneg %p46
    $region27: #{_multilinear_fwd.1} parent=1 // pred_check_branch
      %97 = sbr.rel (%p95) target = $region29
    $region28: #{_multilinear_fwd.1} parent=1 // pred_region
      %v98 = vld [vmem:[%s3] sm:$0xff]
      %v99 = vld [vmem:[%s3 + $0x8] sm:$0xff]
      %v100 = vld [vmem:[%s2] sm:$0x1]
      %v102 = vperm.slane %v100, 0
      %v104 = vadd.f32 %v98, %v102
      %v105 = vadd.f32 %v99, %v102
      %106 = vst.msk [vmem:[%s3] sm:$0xff] %vm61, %v104
      %107 = vst.msk [vmem:[%s3 + $0x8] sm:$0xff] %vm61, %v105
    $region29: #{_multilinear_fwd.1} parent=1 // pred_fallthru
      _
    // Predicated region
    $region30: #{_multilinear_fwd.1} parent=1 // pred_check
      _
    $region31: #{_multilinear_fwd.1} parent=1 // pred_check_branch
      %109 = sbr.rel (0) target = $region33
    $region32: #{_multilinear_fwd.1} parent=1 // pred_region
      _
    $region33: #{_multilinear_fwd.1} parent=1 // pred_fallthru
      _
    // Predicated region
    $region34: #{_multilinear_fwd.1} parent=1 // pred_check
      _
    $region35: #{_multilinear_fwd.1} parent=1 // pred_check_branch
      %111 = sbr.rel (0) target = $region37
    $region36: #{_multilinear_fwd.1} parent=1 // pred_region
      _
    $region37: #{_multilinear_fwd.1} parent=1 // pred_fallthru
      _
    %112 = vsyncpa [#allocation3], 1
    %113 = vsyncpa [#allocation5], 1

</llo_original>
